<compile_context>
chip_gen: v6e
topology: v6e:2x2x1
jax: 0.10.0
libtpu: 0.0.40
codegen_flags: <defaults>
</compile_context>

<pallas_src>
import jax
import jax.numpy as jnp
from jax import lax
from jax.experimental import pallas as pl
from jax.experimental.pallas import tpu as pltpu

Cin = 16
Cout = 4
KH, KW = 3, 3


def _make_kernel(N, H, W):
    HW = H * W

    def conv_logsoftmax_kernel(x_ref, w_ref, b_ref, o_ref):
        # x_ref: (N, Cin, H*W)       NCHW, spatial flattened on lanes
        # w_ref: (Cout, KH*KW*Cin)   im2col weight, K ordered (kh, kw, cin)
        # b_ref: (Cout, 1)
        # o_ref: (N, Cout, H*W)      NCHW output, lane-dense (wrapper crops)
        w = w_ref[...]
        b = b_ref[...]
        for n in range(N):                      # whole batch, one grid step
            x = x_ref[n]                        # (Cin, HW)

            # Build the im2col operand with XLU lane rotations (no sublane-
            # shifted slice copies).  Roll right by (HW - s) == roll left by s.
            cols = []
            for kh in range(KH):
                for kw in range(KW):
                    s = kh * W + kw
                    if s == 0:
                        cols.append(x)
                    else:
                        cols.append(pltpu.roll(x, shift=HW - s, axis=1))
            xcol = jnp.concatenate(cols, axis=0)          # (KH*KW*Cin, HW)

            # Single K=144 contraction on the MXU, f32 accumulation.
            acc = lax.dot_general(
                w, xcol,
                dimension_numbers=(((1,), (0,)), ((), ())),
                preferred_element_type=jnp.float32)        # (Cout, HW)
            acc = acc + b                                   # bias broadcast

            # log_softmax over the channel (sublane) axis, numerically stable.
            m = jnp.max(acc, axis=0, keepdims=True)
            z = acc - m
            lse = jnp.log(jnp.sum(jnp.exp(z), axis=0, keepdims=True))
            o_ref[n] = (z - lse).astype(o_ref.dtype)

    return conv_logsoftmax_kernel


def net_forward(x_nchw, weight_oihw, bias):
    """x_nchw: (N, Cin, H, W) f32 -> (N, Cout, H-2, W-2) f32."""
    N, C, H, W = x_nchw.shape
    assert C == Cin
    Ho, Wo = H - KH + 1, W - KW + 1
    HW = H * W

    # Free reshape (stays NCHW): spatial onto the lane axis.
    x_flat = x_nchw.reshape(N, Cin, HW)
    # (Cout, KH*KW*Cin) with K ordered (kh, kw, cin) to match the kernel.
    w_mat = jnp.transpose(weight_oihw, (0, 2, 3, 1)).reshape(Cout, KH * KW * Cin)
    b_col = bias.reshape(Cout, 1)

    kernel = _make_kernel(N, H, W)

    # No grid: whole batch in one invocation; default BlockSpecs place the
    # (tiny) full arrays in VMEM.  Output last dim is H*W (lane-dense stores).
    out_flat = pl.pallas_call(
        kernel,
        out_shape=jax.ShapeDtypeStruct((N, Cout, HW), jnp.float32),
    )(x_flat, w_mat, b_col)

    # Already NCHW: just crop the (KH-1, KW-1) invalid border of the
    # full-width convolution.  No transpose needed.
    return out_flat.reshape(N, Cout, H, W)[:, :, :Ho, :Wo]


def _reference(x_nchw, weight_oihw, bias):
    y = lax.conv_general_dilated(
        x_nchw, weight_oihw, window_strides=(1, 1), padding="VALID",
        dimension_numbers=("NCHW", "OIHW", "NCHW"))
    y = y + bias[None, :, None, None]
    return jax.nn.log_softmax(y, axis=1)


if __name__ == "__main__":
    key = jax.random.PRNGKey(0)
    k_x, k_w, k_b = jax.random.split(key, 3)

    # Small shapes consistent with the module: batch=2, Cin=16, spatial=16.
    N, H, W = 2, 16, 16
    x = jax.random.normal(k_x, (N, Cin, H, W), dtype=jnp.float32)

    # Deterministic Conv2d init (PyTorch default: U(-k, k), k = 1/sqrt(Cin*KH*KW)).
    fan_in = Cin * KH * KW
    bound = 1.0 / (fan_in ** 0.5)
    weight = jax.random.uniform(k_w, (Cout, Cin, KH, KW), jnp.float32,
                                minval=-bound, maxval=bound)
    bias = jax.random.uniform(k_b, (Cout,), jnp.float32,
                              minval=-bound, maxval=bound)

    out = jax.block_until_ready(net_forward(x, weight, bias))
    ref = jax.block_until_ready(_reference(x, weight, bias))
    assert out.shape == (N, Cout, H - 2, W - 2)
    assert jnp.allclose(out, ref, atol=1e-4, rtol=1e-4)
    print("KERNEL_OK")
</pallas_src>

<mosaic_0001>
module attributes {stable_mosaic.version = 11 : i64} {
  func.func @conv_logsoftmax_kernel(%arg0: memref<2x16x256xf32, #tpu.memory_space<vmem>>, %arg1: memref<4x144xf32, #tpu.memory_space<vmem>>, %arg2: memref<4x1xf32, #tpu.memory_space<vmem>>, %arg3: memref<2x4x256xf32, #tpu.memory_space<vmem>>) attributes {dimension_semantics = [], scalar_prefetch = 0 : i64, scratch_operands = 0 : i64, tpu.core_type = #tpu.core_type<tc>} {
    %c0 = arith.constant 0 : index
    %c0_0 = arith.constant 0 : index
    %0 = vector.load %arg1[%c0, %c0_0] : memref<4x144xf32, #tpu.memory_space<vmem>>, vector<4x144xf32>
    %c0_1 = arith.constant 0 : index
    %c0_2 = arith.constant 0 : index
    %1 = vector.load %arg2[%c0_1, %c0_2] : memref<4x1xf32, #tpu.memory_space<vmem>>, vector<4x1xf32>
    %c0_3 = arith.constant 0 : index
    %c0_4 = arith.constant 0 : index
    %c0_5 = arith.constant 0 : index
    %2 = vector.load %arg0[%c0_3, %c0_4, %c0_5] : memref<2x16x256xf32, #tpu.memory_space<vmem>>, vector<1x16x256xf32>
    %3 = vector.shape_cast %2 : vector<1x16x256xf32> to vector<16x256xf32>
    %c255_i32 = arith.constant 255 : i32
    %4 = tpu.dynamic_rotate %3 by %c255_i32 dim 1 : vector<16x256xf32>, i32 -> vector<16x256xf32>
    %c254_i32 = arith.constant 254 : i32
    %5 = tpu.dynamic_rotate %3 by %c254_i32 dim 1 : vector<16x256xf32>, i32 -> vector<16x256xf32>
    %c240_i32 = arith.constant 240 : i32
    %6 = tpu.dynamic_rotate %3 by %c240_i32 dim 1 : vector<16x256xf32>, i32 -> vector<16x256xf32>
    %c239_i32 = arith.constant 239 : i32
    %7 = tpu.dynamic_rotate %3 by %c239_i32 dim 1 : vector<16x256xf32>, i32 -> vector<16x256xf32>
    %c238_i32 = arith.constant 238 : i32
    %8 = tpu.dynamic_rotate %3 by %c238_i32 dim 1 : vector<16x256xf32>, i32 -> vector<16x256xf32>
    %c224_i32 = arith.constant 224 : i32
    %9 = tpu.dynamic_rotate %3 by %c224_i32 dim 1 : vector<16x256xf32>, i32 -> vector<16x256xf32>
    %c223_i32 = arith.constant 223 : i32
    %10 = tpu.dynamic_rotate %3 by %c223_i32 dim 1 : vector<16x256xf32>, i32 -> vector<16x256xf32>
    %c222_i32 = arith.constant 222 : i32
    %11 = tpu.dynamic_rotate %3 by %c222_i32 dim 1 : vector<16x256xf32>, i32 -> vector<16x256xf32>
    %12 = tpu.concatenate %3, %4, %5, %6, %7, %8, %9, %10, %11 in 0 : vector<16x256xf32>, vector<16x256xf32>, vector<16x256xf32>, vector<16x256xf32>, vector<16x256xf32>, vector<16x256xf32>, vector<16x256xf32>, vector<16x256xf32>, vector<16x256xf32> -> vector<144x256xf32>
    %cst = arith.constant dense<0.000000e+00> : vector<4x256xf32>
    %13 = tpu.matmul %0, %12, %cst {dimension_numbers = #tpu.dot_dimension_numbers<[1], [0], [0], [1], [0, 0, 1, 1], [], []>} : vector<4x144xf32>, vector<144x256xf32>, vector<4x256xf32> -> vector<4x256xf32>
    %14 = vector.broadcast %1 : vector<4x1xf32> to vector<4x256xf32>
    %15 = arith.addf %13, %14 : vector<4x256xf32>
    %cst_6 = arith.constant dense<0xFF800000> : vector<256xf32>
    %16 = vector.multi_reduction <maximumf>, %15, %cst_6 [0] : vector<4x256xf32> to vector<256xf32>
    %17 = vector.shape_cast %16 : vector<256xf32> to vector<1x256xf32>
    %18 = vector.broadcast %17 : vector<1x256xf32> to vector<4x256xf32>
    %19 = arith.subf %15, %18 : vector<4x256xf32>
    %20 = math.exp %19 : vector<4x256xf32>
    %cst_7 = arith.constant dense<0.000000e+00> : vector<256xf32>
    %21 = vector.multi_reduction <add>, %20, %cst_7 [0] : vector<4x256xf32> to vector<256xf32>
    %22 = vector.shape_cast %21 : vector<256xf32> to vector<1x256xf32>
    %23 = math.log %22 : vector<1x256xf32>
    %24 = vector.broadcast %23 : vector<1x256xf32> to vector<4x256xf32>
    %25 = arith.subf %19, %24 : vector<4x256xf32>
    %c0_8 = arith.constant 0 : index
    %c0_9 = arith.constant 0 : index
    %c0_10 = arith.constant 0 : index
    %26 = vector.load %arg3[%c0_8, %c0_9, %c0_10] : memref<2x4x256xf32, #tpu.memory_space<vmem>>, vector<1x4x256xf32>
    %27 = vector.shape_cast %26 : vector<1x4x256xf32> to vector<4x256xf32>
    %28 = vector.shape_cast %25 : vector<4x256xf32> to vector<1x4x256xf32>
    tpu.vector_store %arg3[%c0_8, %c0_9, %c0_10], %28 {strides = array<i32>} : memref<2x4x256xf32, #tpu.memory_space<vmem>>, vector<1x4x256xf32>,
    %c1 = arith.constant 1 : index
    %c0_11 = arith.constant 0 : index
    %c0_12 = arith.constant 0 : index
    %29 = vector.load %arg0[%c1, %c0_11, %c0_12] : memref<2x16x256xf32, #tpu.memory_space<vmem>>, vector<1x16x256xf32>
    %30 = vector.shape_cast %29 : vector<1x16x256xf32> to vector<16x256xf32>
    %c255_i32_13 = arith.constant 255 : i32
    %31 = tpu.dynamic_rotate %30 by %c255_i32_13 dim 1 : vector<16x256xf32>, i32 -> vector<16x256xf32>
    %c254_i32_14 = arith.constant 254 : i32
    %32 = tpu.dynamic_rotate %30 by %c254_i32_14 dim 1 : vector<16x256xf32>, i32 -> vector<16x256xf32>
    %c240_i32_15 = arith.constant 240 : i32
    %33 = tpu.dynamic_rotate %30 by %c240_i32_15 dim 1 : vector<16x256xf32>, i32 -> vector<16x256xf32>
    %c239_i32_16 = arith.constant 239 : i32
    %34 = tpu.dynamic_rotate %30 by %c239_i32_16 dim 1 : vector<16x256xf32>, i32 -> vector<16x256xf32>
    %c238_i32_17 = arith.constant 238 : i32
    %35 = tpu.dynamic_rotate %30 by %c238_i32_17 dim 1 : vector<16x256xf32>, i32 -> vector<16x256xf32>
    %c224_i32_18 = arith.constant 224 : i32
    %36 = tpu.dynamic_rotate %30 by %c224_i32_18 dim 1 : vector<16x256xf32>, i32 -> vector<16x256xf32>
    %c223_i32_19 = arith.constant 223 : i32
    %37 = tpu.dynamic_rotate %30 by %c223_i32_19 dim 1 : vector<16x256xf32>, i32 -> vector<16x256xf32>
    %c222_i32_20 = arith.constant 222 : i32
    %38 = tpu.dynamic_rotate %30 by %c222_i32_20 dim 1 : vector<16x256xf32>, i32 -> vector<16x256xf32>
    %39 = tpu.concatenate %30, %31, %32, %33, %34, %35, %36, %37, %38 in 0 : vector<16x256xf32>, vector<16x256xf32>, vector<16x256xf32>, vector<16x256xf32>, vector<16x256xf32>, vector<16x256xf32>, vector<16x256xf32>, vector<16x256xf32>, vector<16x256xf32> -> vector<144x256xf32>
    %cst_21 = arith.constant dense<0.000000e+00> : vector<4x256xf32>
    %40 = tpu.matmul %0, %39, %cst_21 {dimension_numbers = #tpu.dot_dimension_numbers<[1], [0], [0], [1], [0, 0, 1, 1], [], []>} : vector<4x144xf32>, vector<144x256xf32>, vector<4x256xf32> -> vector<4x256xf32>
    %41 = vector.broadcast %1 : vector<4x1xf32> to vector<4x256xf32>
    %42 = arith.addf %40, %41 : vector<4x256xf32>
    %cst_22 = arith.constant dense<0xFF800000> : vector<256xf32>
    %43 = vector.multi_reduction <maximumf>, %42, %cst_22 [0] : vector<4x256xf32> to vector<256xf32>
    %44 = vector.shape_cast %43 : vector<256xf32> to vector<1x256xf32>
    %45 = vector.broadcast %44 : vector<1x256xf32> to vector<4x256xf32>
    %46 = arith.subf %42, %45 : vector<4x256xf32>
    %47 = math.exp %46 : vector<4x256xf32>
    %cst_23 = arith.constant dense<0.000000e+00> : vector<256xf32>
    %48 = vector.multi_reduction <add>, %47, %cst_23 [0] : vector<4x256xf32> to vector<256xf32>
    %49 = vector.shape_cast %48 : vector<256xf32> to vector<1x256xf32>
    %50 = math.log %49 : vector<1x256xf32>
    %51 = vector.broadcast %50 : vector<1x256xf32> to vector<4x256xf32>
    %52 = arith.subf %46, %51 : vector<4x256xf32>
    %c1_24 = arith.constant 1 : index
    %c0_25 = arith.constant 0 : index
    %c0_26 = arith.constant 0 : index
    %53 = vector.load %arg3[%c1_24, %c0_25, %c0_26] : memref<2x4x256xf32, #tpu.memory_space<vmem>>, vector<1x4x256xf32>
    %54 = vector.shape_cast %53 : vector<1x4x256xf32> to vector<4x256xf32>
    %55 = vector.shape_cast %52 : vector<4x256xf32> to vector<1x4x256xf32>
    tpu.vector_store %arg3[%c1_24, %c0_25, %c0_26], %55 {strides = array<i32>} : memref<2x4x256xf32, #tpu.memory_space<vmem>>, vector<1x4x256xf32>,
    return
  }
}

</mosaic_0001>

<llo_original>
// kernel: tpu_custom_call.1
$region0: #{tpu_custom_call.1}
  #allocation0 [shape = 'u32[]', space=smem, size = 0x4, offset = 0x4, fixed_abs, tag = 'smem constant byte address 0x4 - core index']
  #allocation1 [shape = 'u32[144,128]{1,0:T(1,128)}', space=vmem, size = 0x12000, scoped, tag = 'internal scratch']
  %s0 = inlined_call_operand.hbm [shape: f32[2,16,256], index: 0, kind: input, shape index: {}]
  %s1 = inlined_call_operand.hbm [shape: f32[4,144], index: 1, kind: input, shape index: {}]
  %s2 = inlined_call_operand.vmem [shape: f32[4,1], index: 2, kind: input, shape index: {}]
  %s3 = inlined_call_operand.hbm [shape: f32[2,4,256], index: 3, kind: output, shape index: {}]
  %s4 = sld [smem:[#allocation0]]
  $region30: #{tpu_custom_call.1} parent=0
    _
  %s6 = ssub.s32 1, %s4
  %s7 = scalar_select 0, %s6, %s4
  $region1: #{tpu_custom_call.1} parent=0
    #allocation2 [shape = 'u8[32768]{0}', space=vmem, size = 0x8000, scoped, tag = 'input window, operand 0, single buffered']
    #allocation3 [shape = 's32[1]{0}', space=sflag, size = 0x4, scoped, tag = 'scoped memory for tpu_custom_call.1']
    #allocation4 [shape = 's32[1]{0}', space=sflag, size = 0x4, scoped, tag = 'scoped memory for tpu_custom_call.1']
    #allocation5 [shape = 'u8[4096]{0}', space=vmem, size = 0x1000, scoped, tag = 'input window, operand 1, single buffered']
    #allocation6 [shape = 's32[1]{0}', space=sflag, size = 0x4, scoped, tag = 'scoped memory for tpu_custom_call.1']
    #allocation7 [shape = 'u8[8192]{0}', space=vmem, size = 0x2000, scoped, tag = 'output window, operand 0, single buffered']
    %8 = vsyncpa [#allocation3], 0
    %9 = vsyncpa [#allocation6], 0
    %10 = vsyncpa [#allocation4], 0
    // Predicated region
    $region2: #{tpu_custom_call.1} parent=1 // pred_check
      _
    $region3: #{tpu_custom_call.1} parent=1 // pred_check_branch
      %12 = sbr.rel (0) target = $region5
    $region4: #{tpu_custom_call.1} parent=1 // pred_region
      %s14 = ssub.s32 1024, 1024
      %15 = vsyncadd [#allocation3], %s14
      %s16 = sshll.u32 [#allocation2], 4
      %s17 = int_to_ptr.vmem [resolvable:$true] %s16
      %22 = dma.hbm_to_vmem [thread:$0]  %s0, 1024, %s17, [#allocation3], 256, 256, 16
    $region5: #{tpu_custom_call.1} parent=1 // pred_fallthru
      _
    // Predicated region
    $region6: #{tpu_custom_call.1} parent=1 // pred_check
      _
    $region7: #{tpu_custom_call.1} parent=1 // pred_check_branch
      %24 = sbr.rel (0) target = $region9
    $region8: #{tpu_custom_call.1} parent=1 // pred_region
      %s26 = ssub.s32 128, 128
      %27 = vsyncadd [#allocation6], %s26
      %s29 = sshll.u32 [#allocation5], 4
      %s30 = int_to_ptr.vmem [resolvable:$true] %s29
      %32 = dma.hbm_to_vmem [thread:$0]  %s1, 128, %s30, [#allocation6]
    $region9: #{tpu_custom_call.1} parent=1 // pred_fallthru
      _
    // Predicated region
    $region10: #{tpu_custom_call.1} parent=1 // pred_check
      _
    $region11: #{tpu_custom_call.1} parent=1 // pred_check_branch
      %34 = sbr.rel (0) target = $region13
    $region12: #{tpu_custom_call.1} parent=1 // pred_region
      _
    $region13: #{tpu_custom_call.1} parent=1 // pred_fallthru
      _
    // Predicated region
    $region14: #{tpu_custom_call.1} parent=1 // pred_check
      _
    $region15: #{tpu_custom_call.1} parent=1 // pred_check_branch
      %36 = sbr.rel (0) target = $region17
    $region16: #{tpu_custom_call.1} parent=1 // pred_region
      %37 = dma.done [#allocation3], 1024
    $region17: #{tpu_custom_call.1} parent=1 // pred_fallthru
      _
    // Predicated region
    $region18: #{tpu_custom_call.1} parent=1 // pred_check
      _
    $region19: #{tpu_custom_call.1} parent=1 // pred_check_branch
      %39 = sbr.rel (0) target = $region21
    $region20: #{tpu_custom_call.1} parent=1 // pred_region
      %40 = dma.done [#allocation6], 128
    $region21: #{tpu_custom_call.1} parent=1 // pred_fallthru
      _
    %v41 = vld [vmem:[#allocation5] sm:$0xff]
    %v42 = vld [vmem:[%s2] sm:$0xf]
    %v43 = vld [vmem:[#allocation2] sm:$0xff]
    %v44 = vld [vmem:[#allocation2 + $0x8] sm:$0xff]
    %v45 = vld [vmem:[#allocation2 + $0x10] sm:$0xff]
    %v46 = vld [vmem:[#allocation2 + $0x18] sm:$0xff]
    %47 = vrot.lane.b32.xlu0 %v43, 127
    %v48 = vpop.permute.xlu0 %47
    %49 = vrot.lane.b32.xlu0 %v45, 127
    %v50 = vpop.permute.xlu0 %49
    %51 = vrot.lane.b32.xlu0 %v44, 127
    %v52 = vpop.permute.xlu0 %51
    %53 = vrot.lane.b32.xlu0 %v46, 127
    %v54 = vpop.permute.xlu0 %53
    %v55 = vlaneseq
    %v56 = vand.u32 %v55, 127
    %vm57 = vcmp.lt.s32.totalorder %v56, 127
    %v58 = vsel %vm57, %v48, %v52
    %v59 = vsel %vm57, %v50, %v54
    %v60 = vsel %vm57, %v52, %v48
    %v61 = vsel %vm57, %v54, %v50
    %62 = vrot.lane.b32.xlu0 %v43, 126
    %v63 = vpop.permute.xlu0 %62
    %64 = vrot.lane.b32.xlu0 %v45, 126
    %v65 = vpop.permute.xlu0 %64
    %66 = vrot.lane.b32.xlu0 %v44, 126
    %v67 = vpop.permute.xlu0 %66
    %68 = vrot.lane.b32.xlu0 %v46, 126
    %v69 = vpop.permute.xlu0 %68
    %vm70 = vcmp.lt.s32.totalorder %v56, 126
    %v71 = vsel %vm70, %v63, %v67
    %v72 = vsel %vm70, %v65, %v69
    %v73 = vsel %vm70, %v67, %v63
    %v74 = vsel %vm70, %v69, %v65
    %75 = vrot.lane.b32.xlu0 %v43, 112
    %v76 = vpop.permute.xlu0 %75
    %77 = vrot.lane.b32.xlu0 %v45, 112
    %v78 = vpop.permute.xlu0 %77
    %79 = vrot.lane.b32.xlu0 %v44, 112
    %v80 = vpop.permute.xlu0 %79
    %81 = vrot.lane.b32.xlu0 %v46, 112
    %v82 = vpop.permute.xlu0 %81
    %vm83 = vcmp.lt.s32.totalorder %v56, 112
    %v84 = vsel %vm83, %v76, %v80
    %v85 = vsel %vm83, %v78, %v82
    %v86 = vsel %vm83, %v80, %v76
    %v87 = vsel %vm83, %v82, %v78
    %88 = vrot.lane.b32.xlu0 %v43, 111
    %v89 = vpop.permute.xlu0 %88
    %90 = vrot.lane.b32.xlu0 %v45, 111
    %v91 = vpop.permute.xlu0 %90
    %92 = vrot.lane.b32.xlu0 %v44, 111
    %v93 = vpop.permute.xlu0 %92
    %94 = vrot.lane.b32.xlu0 %v46, 111
    %v95 = vpop.permute.xlu0 %94
    %vm96 = vcmp.lt.s32.totalorder %v56, 111
    %v97 = vsel %vm96, %v89, %v93
    %v98 = vsel %vm96, %v91, %v95
    %v99 = vsel %vm96, %v93, %v89
    %v100 = vsel %vm96, %v95, %v91
    %101 = vrot.lane.b32.xlu0 %v43, 110
    %v102 = vpop.permute.xlu0 %101
    %103 = vrot.lane.b32.xlu0 %v45, 110
    %v104 = vpop.permute.xlu0 %103
    %105 = vrot.lane.b32.xlu0 %v44, 110
    %v106 = vpop.permute.xlu0 %105
    %107 = vrot.lane.b32.xlu0 %v46, 110
    %v108 = vpop.permute.xlu0 %107
    %vm109 = vcmp.lt.s32.totalorder %v56, 110
    %v110 = vsel %vm109, %v102, %v106
    %v111 = vsel %vm109, %v104, %v108
    %v112 = vsel %vm109, %v106, %v102
    %v113 = vsel %vm109, %v108, %v104
    %114 = vrot.lane.b32.xlu0 %v43, 96
    %v115 = vpop.permute.xlu0 %114
    %116 = vrot.lane.b32.xlu0 %v45, 96
    %v117 = vpop.permute.xlu0 %116
    %118 = vrot.lane.b32.xlu0 %v44, 96
    %v119 = vpop.permute.xlu0 %118
    %120 = vrot.lane.b32.xlu0 %v46, 96
    %v121 = vpop.permute.xlu0 %120
    %vm122 = vcmp.lt.s32.totalorder %v56, 96
    %v123 = vsel %vm122, %v115, %v119
    %v124 = vsel %vm122, %v117, %v121
    %v125 = vsel %vm122, %v119, %v115
    %v126 = vsel %vm122, %v121, %v117
    %127 = vrot.lane.b32.xlu0 %v43, 95
    %v128 = vpop.permute.xlu0 %127
    %129 = vrot.lane.b32.xlu0 %v45, 95
    %v130 = vpop.permute.xlu0 %129
    %131 = vrot.lane.b32.xlu0 %v44, 95
    %v132 = vpop.permute.xlu0 %131
    %133 = vrot.lane.b32.xlu0 %v46, 95
    %v134 = vpop.permute.xlu0 %133
    %vm135 = vcmp.lt.s32.totalorder %v56, 95
    %v136 = vsel %vm135, %v128, %v132
    %v137 = vsel %vm135, %v130, %v134
    %v138 = vsel %vm135, %v132, %v128
    %v139 = vsel %vm135, %v134, %v130
    %140 = vrot.lane.b32.xlu0 %v43, 94
    %v141 = vpop.permute.xlu0 %140
    %142 = vrot.lane.b32.xlu0 %v45, 94
    %v143 = vpop.permute.xlu0 %142
    %144 = vrot.lane.b32.xlu0 %v44, 94
    %v145 = vpop.permute.xlu0 %144
    %146 = vrot.lane.b32.xlu0 %v46, 94
    %v147 = vpop.permute.xlu0 %146
    %vm148 = vcmp.lt.s32.totalorder %v56, 94
    %v149 = vsel %vm148, %v141, %v145
    %v150 = vsel %vm148, %v143, %v147
    %v151 = vsel %vm148, %v145, %v141
    %v152 = vsel %vm148, %v147, %v143
    %154 = vset.pattern.permute.xlu0 0
    %155 = vperm.xlu0 %154, %v42
    %v156 = vpop.permute.xlu0 %155
    %v159 = vcombine.high %v41, %v41
    %vm160 = vcmask 130048
    %v161 = vsel %vm160, %v159, 0
    %163 = vmatprep.subr.mxu0 %v139
    %164 = vmatpush1.msra.mxu0 %v137
    %165 = vmatprep.subr.mxu0 %v138
    %166 = vmatpush1.msra.mxu0 %v136
    %167 = vmatprep.subr.mxu0 %v126
    %168 = vmatpush1.msra.mxu0 %v124
    %169 = vmatprep.subr.mxu0 %v125
    %170 = vmatpush1.msra.mxu0 %v123
    %171 = vmatprep.subr.mxu0 %v113
    %172 = vmatpush1.msra.mxu0 %v111
    %173 = vmatprep.subr.mxu0 %v112
    %174 = vmatpush1.msra.mxu0 %v110
    %175 = vmatprep.subr.mxu0 %v100
    %176 = vmatpush1.msra.mxu0 %v98
    %177 = vmatprep.subr.mxu0 %v99
    %178 = vmatpush1.msra.mxu0 %v97
    %179 = vmatprep.subr.mxu0 %v87
    %180 = vmatpush1.msra.mxu0 %v85
    %181 = vmatprep.subr.mxu0 %v86
    %182 = vmatpush1.msra.mxu0 %v84
    %183 = vmatprep.subr.mxu0 %v74
    %184 = vmatpush1.msra.mxu0 %v72
    %185 = vmatprep.subr.mxu0 %v73
    %186 = vmatpush1.msra.mxu0 %v71
    %187 = vmatprep.subr.mxu0 %v61
    %188 = vmatpush1.msra.mxu0 %v59
    %189 = vmatprep.subr.mxu0 %v60
    %190 = vmatpush1.msra.mxu0 %v58
    %191 = vmatprep.subr.mxu0 %v46
    %192 = vmatpush1.msra.mxu0 %v45
    %193 = vmatprep.subr.mxu0 %v44
    %194 = vmatpush1.msra.mxu0 %v43
    %195 = vmatprep.subr.mxu0 0.0
    %196 = vmatpush2.msra.mxu0 0.0
    %197 = vmatprep.subr.mxu0 0.0
    %198 = vmatpush2.msra.mxu0 0.0
    %199 = vmatprep.subr.mxu0 0.0
    %200 = vmatpush2.msra.mxu0 0.0
    %201 = vmatprep.subr.mxu0 0.0
    %202 = vmatpush2.msra.mxu0 0.0
    %203 = vmatprep.subr.mxu0 0.0
    %204 = vmatpush2.msra.mxu0 0.0
    %205 = vmatprep.subr.mxu0 0.0
    %206 = vmatpush2.msra.mxu0 0.0
    %207 = vmatprep.subr.mxu0 0.0
    %208 = vmatpush2.msra.mxu0 0.0
    %209 = vmatprep.subr.mxu0 0.0
    %210 = vmatpush2.msra.mxu0 0.0
    %211 = vmatprep.subr.mxu0 0.0
    %212 = vmatpush2.msra.mxu0 0.0
    %213 = vmatprep.subr.mxu0 0.0
    %214 = vmatpush2.msra.mxu0 0.0
    %215 = vmatprep.subr.mxu0 0.0
    %216 = vmatpush2.msra.mxu0 0.0
    %217 = vmatprep.subr.mxu0 0.0
    %218 = vmatpush2.msra.mxu0 0.0
    %219 = vmatprep.subr.mxu0 0.0
    %220 = vmatpush2.msra.mxu0 0.0
    %221 = vmatprep.subr.mxu0 0.0
    %222 = vmatpush2.msra.mxu0 0.0
    %223 = vmatprep.subr.mxu0 %v152
    %224 = vmatpush2.msra.mxu0 %v150
    %225 = vmatprep.subr.mxu0 %v151
    %226 = vmatpush2.msra.mxu0 %v149
    %227 = vmatprep.mubr.f32.mxu0 %v161
    %228 = vmatmul.mubr.f32.gmra.mxu0 %v41
    %v229 = vpop.f32.mrf.mxu0
    %v230 = vadd.f32 %v156, %v229
    %v231 = vpop.f32.mrf.mxu0
    %v232 = vadd.f32 %v156, %v231
    %233 = vdwg.mxu0
    %vm234 = vcmask 1043456
    %v235 = vsel %vm234, %v230, -inf
    %v236 = vrot.slane %v235, 4
    %v237 = vmax.f32 %v235, %v236
    %v238 = vrot.slane %v237, 2
    %v239 = vmax.f32 %v237, %v238
    %v240 = vrot.slane %v239, 1
    %v241 = vmax.f32 %v239, %v240
    %v242 = vsel %vm234, %v232, -inf
    %v243 = vrot.slane %v242, 4
    %v244 = vmax.f32 %v242, %v243
    %v245 = vrot.slane %v244, 2
    %v246 = vmax.f32 %v244, %v245
    %v247 = vrot.slane %v246, 1
    %v248 = vmax.f32 %v246, %v247
    %v249 = vsub.f32 %v230, %v241
    %v250 = vsub.f32 %v232, %v248
    %v251 = vmul.f32 %v249, 1.442695
    %v252 = vpow.pop %v251
    %v253 = vmul.f32 %v250, 1.442695
    %v254 = vpow.pop %v253
    %v255 = vsel %vm234, %v252, 0.0
    %v256 = vrot.slane %v255, 4
    %v257 = vadd.f32 %v255, %v256
    %v258 = vrot.slane %v257, 2
    %v259 = vadd.f32 %v257, %v258
    %v260 = vrot.slane %v259, 1
    %v261 = vadd.f32 %v259, %v260
    %v262 = vsel %vm234, %v254, 0.0
    %v263 = vrot.slane %v262, 4
    %v264 = vadd.f32 %v262, %v263
    %v265 = vrot.slane %v264, 2
    %v266 = vadd.f32 %v264, %v265
    %v267 = vrot.slane %v266, 1
    %v268 = vadd.f32 %v266, %v267
    %v269 = vlog2.pop %v261
    %v270 = vmul.f32 %v269, 0.6931472
    %v271 = vlog2.pop %v268
    %v272 = vmul.f32 %v271, 0.6931472
    %v273 = vsub.f32 %v249, %v270
    %v274 = vsub.f32 %v250, %v272
    %v277 = vcombine.low %v273, %v274
    %279 = vst [vmem:[#allocation7] sm:$0xff] %v277
    %s280 = scalar_lea.vmem [#allocation2], 32
    %v281 = vld [vmem:[%s280] sm:$0xff]
    %v282 = vld [vmem:[%s280 + $0x8] sm:$0xff]
    %v283 = vld [vmem:[%s280 + $0x10] sm:$0xff]
    %v284 = vld [vmem:[%s280 + $0x18] sm:$0xff]
    %285 = vrot.lane.b32.xlu0 %v281, 127
    %v286 = vpop.permute.xlu0 %285
    %287 = vrot.lane.b32.xlu0 %v283, 127
    %v288 = vpop.permute.xlu0 %287
    %289 = vrot.lane.b32.xlu0 %v282, 127
    %v290 = vpop.permute.xlu0 %289
    %291 = vrot.lane.b32.xlu0 %v284, 127
    %v292 = vpop.permute.xlu0 %291
    %v293 = vsel %vm57, %v286, %v290
    %v294 = vsel %vm57, %v288, %v292
    %v295 = vsel %vm57, %v290, %v286
    %v296 = vsel %vm57, %v292, %v288
    %297 = vrot.lane.b32.xlu0 %v281, 126
    %v298 = vpop.permute.xlu0 %297
    %299 = vrot.lane.b32.xlu0 %v283, 126
    %v300 = vpop.permute.xlu0 %299
    %301 = vrot.lane.b32.xlu0 %v282, 126
    %v302 = vpop.permute.xlu0 %301
    %303 = vrot.lane.b32.xlu0 %v284, 126
    %v304 = vpop.permute.xlu0 %303
    %v305 = vsel %vm70, %v298, %v302
    %v306 = vsel %vm70, %v300, %v304
    %v307 = vsel %vm70, %v302, %v298
    %v308 = vsel %vm70, %v304, %v300
    %309 = vrot.lane.b32.xlu0 %v281, 112
    %v310 = vpop.permute.xlu0 %309
    %311 = vrot.lane.b32.xlu0 %v283, 112
    %v312 = vpop.permute.xlu0 %311
    %313 = vrot.lane.b32.xlu0 %v282, 112
    %v314 = vpop.permute.xlu0 %313
    %315 = vrot.lane.b32.xlu0 %v284, 112
    %v316 = vpop.permute.xlu0 %315
    %v317 = vsel %vm83, %v310, %v314
    %v318 = vsel %vm83, %v312, %v316
    %v319 = vsel %vm83, %v314, %v310
    %v320 = vsel %vm83, %v316, %v312
    %321 = vrot.lane.b32.xlu0 %v281, 111
    %v322 = vpop.permute.xlu0 %321
    %323 = vrot.lane.b32.xlu0 %v283, 111
    %v324 = vpop.permute.xlu0 %323
    %325 = vrot.lane.b32.xlu0 %v282, 111
    %v326 = vpop.permute.xlu0 %325
    %327 = vrot.lane.b32.xlu0 %v284, 111
    %v328 = vpop.permute.xlu0 %327
    %v329 = vsel %vm96, %v322, %v326
    %v330 = vsel %vm96, %v324, %v328
    %v331 = vsel %vm96, %v326, %v322
    %v332 = vsel %vm96, %v328, %v324
    %333 = vrot.lane.b32.xlu0 %v281, 110
    %v334 = vpop.permute.xlu0 %333
    %335 = vrot.lane.b32.xlu0 %v283, 110
    %v336 = vpop.permute.xlu0 %335
    %337 = vrot.lane.b32.xlu0 %v282, 110
    %v338 = vpop.permute.xlu0 %337
    %339 = vrot.lane.b32.xlu0 %v284, 110
    %v340 = vpop.permute.xlu0 %339
    %v341 = vsel %vm109, %v334, %v338
    %v342 = vsel %vm109, %v336, %v340
    %v343 = vsel %vm109, %v338, %v334
    %v344 = vsel %vm109, %v340, %v336
    %345 = vrot.lane.b32.xlu0 %v281, 96
    %v346 = vpop.permute.xlu0 %345
    %347 = vrot.lane.b32.xlu0 %v283, 96
    %v348 = vpop.permute.xlu0 %347
    %349 = vrot.lane.b32.xlu0 %v282, 96
    %v350 = vpop.permute.xlu0 %349
    %351 = vrot.lane.b32.xlu0 %v284, 96
    %v352 = vpop.permute.xlu0 %351
    %v353 = vsel %vm122, %v346, %v350
    %v354 = vsel %vm122, %v348, %v352
    %v355 = vsel %vm122, %v350, %v346
    %v356 = vsel %vm122, %v352, %v348
    %357 = vrot.lane.b32.xlu0 %v281, 95
    %v358 = vpop.permute.xlu0 %357
    %359 = vrot.lane.b32.xlu0 %v283, 95
    %v360 = vpop.permute.xlu0 %359
    %361 = vrot.lane.b32.xlu0 %v282, 95
    %v362 = vpop.permute.xlu0 %361
    %363 = vrot.lane.b32.xlu0 %v284, 95
    %v364 = vpop.permute.xlu0 %363
    %v365 = vsel %vm135, %v358, %v362
    %v366 = vsel %vm135, %v360, %v364
    %v367 = vsel %vm135, %v362, %v358
    %v368 = vsel %vm135, %v364, %v360
    %369 = vrot.lane.b32.xlu0 %v281, 94
    %v370 = vpop.permute.xlu0 %369
    %371 = vrot.lane.b32.xlu0 %v283, 94
    %v372 = vpop.permute.xlu0 %371
    %373 = vrot.lane.b32.xlu0 %v282, 94
    %v374 = vpop.permute.xlu0 %373
    %375 = vrot.lane.b32.xlu0 %v284, 94
    %v376 = vpop.permute.xlu0 %375
    %v377 = vsel %vm148, %v370, %v374
    %v378 = vsel %vm148, %v372, %v376
    %v379 = vsel %vm148, %v374, %v370
    %v380 = vsel %vm148, %v376, %v372
    %381 = vmatprep.subr.mxu0 %v368
    %382 = vmatpush1.msra.mxu0 %v366
    %383 = vmatprep.subr.mxu0 %v367
    %384 = vmatpush1.msra.mxu0 %v365
    %385 = vmatprep.subr.mxu0 %v356
    %386 = vmatpush1.msra.mxu0 %v354
    %387 = vmatprep.subr.mxu0 %v355
    %388 = vmatpush1.msra.mxu0 %v353
    %389 = vmatprep.subr.mxu0 %v344
    %390 = vmatpush1.msra.mxu0 %v342
    %391 = vmatprep.subr.mxu0 %v343
    %392 = vmatpush1.msra.mxu0 %v341
    %393 = vmatprep.subr.mxu0 %v332
    %394 = vmatpush1.msra.mxu0 %v330
    %395 = vmatprep.subr.mxu0 %v331
    %396 = vmatpush1.msra.mxu0 %v329
    %397 = vmatprep.subr.mxu0 %v320
    %398 = vmatpush1.msra.mxu0 %v318
    %399 = vmatprep.subr.mxu0 %v319
    %400 = vmatpush1.msra.mxu0 %v317
    %401 = vmatprep.subr.mxu0 %v308
    %402 = vmatpush1.msra.mxu0 %v306
    %403 = vmatprep.subr.mxu0 %v307
    %404 = vmatpush1.msra.mxu0 %v305
    %405 = vmatprep.subr.mxu0 %v296
    %406 = vmatpush1.msra.mxu0 %v294
    %407 = vmatprep.subr.mxu0 %v295
    %408 = vmatpush1.msra.mxu0 %v293
    %409 = vmatprep.subr.mxu0 %v284
    %410 = vmatpush1.msra.mxu0 %v283
    %411 = vmatprep.subr.mxu0 %v282
    %412 = vmatpush1.msra.mxu0 %v281
    %413 = vmatprep.subr.mxu0 0.0
    %414 = vmatpush2.msra.mxu0 0.0
    %415 = vmatprep.subr.mxu0 0.0
    %416 = vmatpush2.msra.mxu0 0.0
    %417 = vmatprep.subr.mxu0 0.0
    %418 = vmatpush2.msra.mxu0 0.0
    %419 = vmatprep.subr.mxu0 0.0
    %420 = vmatpush2.msra.mxu0 0.0
    %421 = vmatprep.subr.mxu0 0.0
    %422 = vmatpush2.msra.mxu0 0.0
    %423 = vmatprep.subr.mxu0 0.0
    %424 = vmatpush2.msra.mxu0 0.0
    %425 = vmatprep.subr.mxu0 0.0
    %426 = vmatpush2.msra.mxu0 0.0
    %427 = vmatprep.subr.mxu0 0.0
    %428 = vmatpush2.msra.mxu0 0.0
    %429 = vmatprep.subr.mxu0 0.0
    %430 = vmatpush2.msra.mxu0 0.0
    %431 = vmatprep.subr.mxu0 0.0
    %432 = vmatpush2.msra.mxu0 0.0
    %433 = vmatprep.subr.mxu0 0.0
    %434 = vmatpush2.msra.mxu0 0.0
    %435 = vmatprep.subr.mxu0 0.0
    %436 = vmatpush2.msra.mxu0 0.0
    %437 = vmatprep.subr.mxu0 0.0
    %438 = vmatpush2.msra.mxu0 0.0
    %439 = vmatprep.subr.mxu0 0.0
    %440 = vmatpush2.msra.mxu0 0.0
    %441 = vmatprep.subr.mxu0 %v380
    %442 = vmatpush2.msra.mxu0 %v378
    %443 = vmatprep.subr.mxu0 %v379
    %444 = vmatpush2.msra.mxu0 %v377
    %445 = vmatprep.mubr.f32.mxu0 %v161
    %446 = vmatmul.mubr.f32.gmra.mxu0 %v41
    %v447 = vpop.f32.mrf.mxu0
    %v448 = vadd.f32 %v156, %v447
    %v449 = vpop.f32.mrf.mxu0
    %v450 = vadd.f32 %v156, %v449
    %451 = vdwg.mxu0
    %v452 = vsel %vm234, %v448, -inf
    %v453 = vrot.slane %v452, 4
    %v454 = vmax.f32 %v452, %v453
    %v455 = vrot.slane %v454, 2
    %v456 = vmax.f32 %v454, %v455
    %v457 = vrot.slane %v456, 1
    %v458 = vmax.f32 %v456, %v457
    %v459 = vsel %vm234, %v450, -inf
    %v460 = vrot.slane %v459, 4
    %v461 = vmax.f32 %v459, %v460
    %v462 = vrot.slane %v461, 2
    %v463 = vmax.f32 %v461, %v462
    %v464 = vrot.slane %v463, 1
    %v465 = vmax.f32 %v463, %v464
    %v466 = vsub.f32 %v448, %v458
    %v467 = vsub.f32 %v450, %v465
    %v468 = vmul.f32 %v466, 1.442695
    %v469 = vpow.pop %v468
    %v470 = vmul.f32 %v467, 1.442695
    %v471 = vpow.pop %v470
    %v472 = vsel %vm234, %v469, 0.0
    %v473 = vrot.slane %v472, 4
    %v474 = vadd.f32 %v472, %v473
    %v475 = vrot.slane %v474, 2
    %v476 = vadd.f32 %v474, %v475
    %v477 = vrot.slane %v476, 1
    %v478 = vadd.f32 %v476, %v477
    %v479 = vsel %vm234, %v471, 0.0
    %v480 = vrot.slane %v479, 4
    %v481 = vadd.f32 %v479, %v480
    %v482 = vrot.slane %v481, 2
    %v483 = vadd.f32 %v481, %v482
    %v484 = vrot.slane %v483, 1
    %v485 = vadd.f32 %v483, %v484
    %v486 = vlog2.pop %v478
    %v487 = vmul.f32 %v486, 0.6931472
    %v488 = vlog2.pop %v485
    %v489 = vmul.f32 %v488, 0.6931472
    %v490 = vsub.f32 %v466, %v487
    %v491 = vsub.f32 %v467, %v489
    %v494 = vcombine.low %v490, %v491
    %s496 = scalar_lea.vmem [#allocation7], 8
    %497 = vst [vmem:[%s496] sm:$0xff] %v494
    // Predicated region
    $region22: #{tpu_custom_call.1} parent=1 // pred_check
      _
    $region23: #{tpu_custom_call.1} parent=1 // pred_check_branch
      %499 = sbr.rel (0) target = $region25
    $region24: #{tpu_custom_call.1} parent=1 // pred_region
      %s501 = ssub.s32 256, 256
      %502 = vsyncadd [#allocation4], %s501
      %s503 = sshll.u32 [#allocation7], 4
      %s504 = int_to_ptr.vmem [resolvable:$true] %s503
      %509 = dma.vmem_to_hbm [thread:$0]  %s504, 256, %s3, [#allocation4], 128, 128, 8
    $region25: #{tpu_custom_call.1} parent=1 // pred_fallthru
      _
    // Predicated region
    $region26: #{tpu_custom_call.1} parent=1 // pred_check
      _
    $region27: #{tpu_custom_call.1} parent=1 // pred_check_branch
      %511 = sbr.rel (0) target = $region29
    $region28: #{tpu_custom_call.1} parent=1 // pred_region
      %512 = dma.done [#allocation4], 256
    $region29: #{tpu_custom_call.1} parent=1 // pred_fallthru
      _
    %513 = vsyncpa [#allocation3], 1
    %514 = vsyncpa [#allocation6], 1
    %515 = vsyncpa [#allocation4], 1

</llo_original>
